<compile_context>
chip_gen: v6e
topology: v6e:2x2x1
jax: 0.10.0
libtpu: 0.0.40
codegen_flags: <defaults>
</compile_context>

<pallas_src>
import jax
import jax.numpy as jnp
from jax.experimental import pallas as pl
from jax.experimental.pallas import tpu as pltpu


def _pos_enc_kernel(x_ref, row0_ref, pos_tail_ref, o_ref):
    # x_ref:        (BB, S, D)    batch block of patch tokens (native dtype)
    # row0_ref:     (1, D)        class_token + pos_enc[0]  (batch-invariant)
    # pos_tail_ref: (S, D)        pos_enc[1:]
    # o_ref:        (BB, S+1, D)  output batch block
    bb, s_plus_1, d = o_ref.shape
    s = s_plus_1 - 1

    # Row 0 of every batch element: broadcast of the precomputed class-token row.
    o_ref[:, pl.ds(0, 1), :] = jnp.broadcast_to(
        row0_ref[...][None, :, :], (bb, 1, d)
    )
    # Rows 1..S: in-kernel cast (VPU, hidden under DMA) + elementwise add.
    # NOTE: when B % BB != 0 the padded x rows land only in the out-of-bounds part
    # of the output block, which Pallas masks on writeback — keep this two-store
    # structure if modifying.
    o_ref[:, pl.ds(1, s), :] = (
        x_ref[...].astype(o_ref.dtype) + pos_tail_ref[...][None, :, :]
    )


def _ceil_div(a, b):
    return -(-a // b)


def _pad_to(n, m):
    return _ceil_div(n, m) * m


def _tpu_budget():
    """(target x-tile bytes, working-set budget bytes, vmem_limit cap bytes)."""
    kind = ""
    try:
        kind = jax.devices()[0].device_kind.lower()
    except Exception:
        pass
    if "v7" in kind or "7x" in kind:
        target, budget, cap = 7 << 20, 34 << 20, 48 << 20      # 64 MiB physical/TC
    elif "v6" in kind:
        target, budget, cap = 5 << 20, 26 << 20, 64 << 20      # 128 MiB physical
    elif "v5" in kind:
        target, budget, cap = 5 << 19, 13 << 20, 32 << 20      # stay near scoped 16 MiB
    else:
        target, budget, cap = 2 << 20, 12 << 20, 32 << 20      # conservative default
    # Refine the cap with the reported VMEM capacity when available.
    try:
        info = pltpu.get_tpu_info()
        vmem_cap = getattr(info, "vmem_capacity_bytes", None)
        if vmem_cap:
            cap = min(cap, int(0.6 * vmem_cap))
    except Exception:
        pass
    return target, budget, cap


def _vmem_estimate(bb, S, D, x_itemsize, out_itemsize):
    """Conservative VMEM working-set estimate incl. (8,128) layout padding."""
    d_p = _pad_to(D, 128)
    x_tile = bb * _pad_to(S, 8) * d_p * x_itemsize
    o_tile = bb * _pad_to(S + 1, 8) * d_p * out_itemsize
    consts = (_pad_to(1, 8) + _pad_to(S, 8)) * d_p * out_itemsize
    # x / out tiles double-buffered by the pipeline; constants counted twice to be safe.
    return 2 * x_tile + 2 * o_tile + 2 * consts


def _choose_batch_block(B, S, D, x_itemsize, out_itemsize):
    """Pick (bb, grid_b, vmem_limit_bytes) for the detected TPU generation."""
    target, budget, cap = _tpu_budget()

    per_batch = max(1, _pad_to(S, 8) * _pad_to(D, 128) * x_itemsize)
    bb = max(1, min(B, target // per_batch))
    while bb > 1 and _vmem_estimate(bb, S, D, x_itemsize, out_itemsize) > budget:
        bb = max(1, bb // 2)

    # >=4 grid steps (>=2 per v7x TensorCore) when the batch allows, else >=2.
    if B >= 4:
        bb = min(bb, B // 4)
    elif B >= 2:
        bb = min(bb, B // 2)
    bb = max(1, bb)

    # Prefer an even number of grid steps so both v7x cores get equal work.
    grid_b = _ceil_div(B, bb)
    if grid_b % 2 == 1 and grid_b < B:
        bb_try = _ceil_div(B, grid_b + 1)
        if _ceil_div(B, bb_try) % 2 == 0:
            bb = bb_try
            grid_b = _ceil_div(B, bb)

    est = _vmem_estimate(bb, S, D, x_itemsize, out_itemsize)
    vmem_limit = int(min(cap, max(2 * est, 16 << 20)))
    return bb, grid_b, vmem_limit


def positional_encoding(x, class_token, pos_enc, *, batch_block=None):
    """x: (B, S, D); class_token: (D,); pos_enc: (S+1, D) -> (B, S+1, D)."""
    B, S, D = x.shape
    # TODO(synk): positional interpolation for seq_len mismatch is not implemented,
    # mirroring the PyTorch NotImplementedError.
    assert pos_enc.shape == (S + 1, D), "seq_len mismatch (interpolation not implemented)"
    assert class_token.shape == (D,)

    out_dtype = jnp.result_type(x.dtype, class_token.dtype, pos_enc.dtype)

    # Batch-invariant pieces, computed once outside the grid (tiny; negligible cost).
    row0 = (class_token.astype(out_dtype) + pos_enc[0].astype(out_dtype)).reshape(1, D)
    pos_tail = pos_enc[1:].astype(out_dtype)                                   # (S, D)

    x_itemsize = jnp.dtype(x.dtype).itemsize
    out_itemsize = jnp.dtype(out_dtype).itemsize
    if batch_block is None:
        bb, grid_b, vmem_limit = _choose_batch_block(B, S, D, x_itemsize, out_itemsize)
    else:
        bb = max(1, int(batch_block))
        grid_b = _ceil_div(B, bb)
        vmem_limit = int(
            min(48 << 20, max(2 * _vmem_estimate(bb, S, D, x_itemsize, out_itemsize),
                              16 << 20)))

    def _run(single_buffer_consts):
        const_kwargs = {}
        if single_buffer_consts and hasattr(pl, "Buffered"):
            const_kwargs = dict(pipeline_mode=pl.Buffered(1))
        grid_spec = pltpu.PrefetchScalarGridSpec(
            num_scalar_prefetch=0,
            grid=(grid_b,),
            in_specs=[
                pl.BlockSpec((bb, S, D), lambda b: (b, 0, 0)),
                pl.BlockSpec((1, D), lambda b: (0, 0), **const_kwargs),   # resident
                pl.BlockSpec((S, D), lambda b: (0, 0), **const_kwargs),   # resident
            ],
            out_specs=pl.BlockSpec((bb, S + 1, D), lambda b: (b, 0, 0)),
        )
        return pl.pallas_call(
            _pos_enc_kernel,
            out_shape=jax.ShapeDtypeStruct((B, S + 1, D), out_dtype),
            grid_spec=grid_spec,
            compiler_params=pltpu.CompilerParams(
                dimension_semantics=("parallel",),
                vmem_limit_bytes=vmem_limit,
            ),
        )(x, row0, pos_tail)

    try:
        return _run(True)
    except Exception:
        # Fallback for JAX versions that reject pipeline_mode / Buffered(1) on
        # pallas_call BlockSpecs: identical kernel, default double-buffering.
        return _run(False)


if __name__ == "__main__":
    # Module config: img_size=16, patch_size=4 -> seq_len = (16//4)**2 = 16; dsize=32
    img_size, patch_size, dsize = 16, 4, 32
    seq_len = (img_size // patch_size) ** 2
    B = 2

    key = jax.random.PRNGKey(0)
    k_x, k_cls, k_pos = jax.random.split(key, 3)

    x = jax.random.normal(k_x, (B, seq_len, dsize), dtype=jnp.float32)
    class_token = jax.random.normal(k_cls, (dsize,), dtype=jnp.float32)
    pos_enc = jax.random.normal(k_pos, (seq_len + 1, dsize), dtype=jnp.float32)

    out = positional_encoding(x, class_token, pos_enc)
    out = jax.block_until_ready(out)

    # Reference check (plain JAX, mirrors the PyTorch forward)
    cls_rep = jnp.broadcast_to(class_token[None, None, :], (B, 1, dsize))
    ref = jnp.concatenate([cls_rep, x], axis=1) + pos_enc[None, :, :]
    assert out.shape == (B, seq_len + 1, dsize)
    assert jnp.allclose(out, ref, atol=1e-6), "mismatch vs reference"

    print("KERNEL_OK")
</pallas_src>

<mosaic_0001>
module attributes {stable_mosaic.version = 11 : i64} {
  func.func @_pos_enc_kernel(%arg0: i32, %arg1: memref<1x16x32xf32, #tpu.memory_space<vmem>>, %arg2: memref<1x32xf32, #tpu.memory_space<vmem>>, %arg3: memref<16x32xf32, #tpu.memory_space<vmem>>, %arg4: memref<1x17x32xf32, #tpu.memory_space<vmem>>) attributes {dimension_semantics = [#tpu.dimension_semantics<parallel>], iteration_bounds = array<i64: 2>, scalar_prefetch = 0 : i64, scratch_operands = 0 : i64, tpu.core_type = #tpu.core_type<tc>, window_params = [{transform_indices = @transform_0, window_bounds = array<i64: 1, 16, 32>}, {pipeline_mode = #tpu.pipeline_mode<synchronous>, transform_indices = @transform_1, window_bounds = array<i64: 1, 32>}, {pipeline_mode = #tpu.pipeline_mode<synchronous>, transform_indices = @transform_2, window_bounds = array<i64: 16, 32>}, {transform_indices = @transform_3, window_bounds = array<i64: 1, 17, 32>}]} {
    %c0 = arith.constant 0 : index
    %c0_0 = arith.constant 0 : index
    %0 = vector.load %arg2[%c0, %c0_0] : memref<1x32xf32, #tpu.memory_space<vmem>>, vector<1x32xf32>
    %1 = vector.shape_cast %0 : vector<1x32xf32> to vector<1x1x32xf32>
    %c0_1 = arith.constant 0 : index
    %c0_2 = arith.constant 0 : index
    %c0_3 = arith.constant 0 : index
    %2 = vector.load %arg4[%c0_1, %c0_2, %c0_3] : memref<1x17x32xf32, #tpu.memory_space<vmem>>, vector<1x1x32xf32>
    tpu.vector_store %arg4[%c0_1, %c0_2, %c0_3], %1 {strides = array<i32>} : memref<1x17x32xf32, #tpu.memory_space<vmem>>, vector<1x1x32xf32>,
    %c0_4 = arith.constant 0 : index
    %c0_5 = arith.constant 0 : index
    %c0_6 = arith.constant 0 : index
    %3 = vector.load %arg1[%c0_4, %c0_5, %c0_6] : memref<1x16x32xf32, #tpu.memory_space<vmem>>, vector<1x16x32xf32>
    %c0_7 = arith.constant 0 : index
    %c0_8 = arith.constant 0 : index
    %4 = vector.load %arg3[%c0_7, %c0_8] : memref<16x32xf32, #tpu.memory_space<vmem>>, vector<16x32xf32>
    %5 = vector.shape_cast %4 : vector<16x32xf32> to vector<1x16x32xf32>
    %6 = arith.addf %3, %5 : vector<1x16x32xf32>
    %c0_9 = arith.constant 0 : index
    %c1 = arith.constant 1 : index
    %c0_10 = arith.constant 0 : index
    %7 = vector.load %arg4[%c0_9, %c1, %c0_10] : memref<1x17x32xf32, #tpu.memory_space<vmem>>, vector<1x16x32xf32>
    tpu.vector_store %arg4[%c0_9, %c1, %c0_10], %6 {strides = array<i32>} : memref<1x17x32xf32, #tpu.memory_space<vmem>>, vector<1x16x32xf32>,
    return
  }
  func.func @transform_0(%arg0: i32) -> (i32, i32, i32) {
    %c0_i32 = arith.constant 0 : i32
    %c0_i32_0 = arith.constant 0 : i32
    %c0_i32_1 = arith.constant 0 : i32
    return %arg0, %c0_i32, %c0_i32_0 : i32, i32, i32
  }
  func.func @transform_1(%arg0: i32) -> (i32, i32) {
    %c0_i32 = arith.constant 0 : i32
    %c0_i32_0 = arith.constant 0 : i32
    %c0_i32_1 = arith.constant 0 : i32
    return %c0_i32, %c0_i32_0 : i32, i32
  }
  func.func @transform_2(%arg0: i32) -> (i32, i32) {
    %c0_i32 = arith.constant 0 : i32
    %c0_i32_0 = arith.constant 0 : i32
    %c0_i32_1 = arith.constant 0 : i32
    return %c0_i32, %c0_i32_0 : i32, i32
  }
  func.func @transform_3(%arg0: i32) -> (i32, i32, i32) {
    %c0_i32 = arith.constant 0 : i32
    %c0_i32_0 = arith.constant 0 : i32
    %c0_i32_1 = arith.constant 0 : i32
    return %arg0, %c0_i32, %c0_i32_0 : i32, i32, i32
  }
}

module attributes {stable_mosaic.version = 11 : i64} {
  func.func @_pos_enc_kernel(%arg0: i32, %arg1: memref<1x16x32xf32, #tpu.memory_space<vmem>>, %arg2: memref<1x32xf32, #tpu.memory_space<vmem>>, %arg3: memref<16x32xf32, #tpu.memory_space<vmem>>, %arg4: memref<1x17x32xf32, #tpu.memory_space<vmem>>) attributes {dimension_semantics = [#tpu.dimension_semantics<parallel>], iteration_bounds = array<i64: 2>, scalar_prefetch = 0 : i64, scratch_operands = 0 : i64, tpu.core_type = #tpu.core_type<tc>, window_params = [{transform_indices = @transform_0, window_bounds = array<i64: 1, 16, 32>}, {pipeline_mode = #tpu.pipeline_mode<synchronous>, transform_indices = @transform_1, window_bounds = array<i64: 1, 32>}, {pipeline_mode = #tpu.pipeline_mode<synchronous>, transform_indices = @transform_2, window_bounds = array<i64: 16, 32>}, {transform_indices = @transform_3, window_bounds = array<i64: 1, 17, 32>}]} {
    %c0 = arith.constant 0 : index
    %c0_0 = arith.constant 0 : index
    %0 = vector.load %arg2[%c0, %c0_0] : memref<1x32xf32, #tpu.memory_space<vmem>>, vector<1x32xf32>
    %1 = vector.shape_cast %0 : vector<1x32xf32> to vector<1x1x32xf32>
    %c0_1 = arith.constant 0 : index
    %c0_2 = arith.constant 0 : index
    %c0_3 = arith.constant 0 : index
    %2 = vector.load %arg4[%c0_1, %c0_2, %c0_3] : memref<1x17x32xf32, #tpu.memory_space<vmem>>, vector<1x1x32xf32>
    tpu.vector_store %arg4[%c0_1, %c0_2, %c0_3], %1 {strides = array<i32>} : memref<1x17x32xf32, #tpu.memory_space<vmem>>, vector<1x1x32xf32>,
    %c0_4 = arith.constant 0 : index
    %c0_5 = arith.constant 0 : index
    %c0_6 = arith.constant 0 : index
    %3 = vector.load %arg1[%c0_4, %c0_5, %c0_6] : memref<1x16x32xf32, #tpu.memory_space<vmem>>, vector<1x16x32xf32>
    %c0_7 = arith.constant 0 : index
    %c0_8 = arith.constant 0 : index
    %4 = vector.load %arg3[%c0_7, %c0_8] : memref<16x32xf32, #tpu.memory_space<vmem>>, vector<16x32xf32>
    %5 = vector.shape_cast %4 : vector<16x32xf32> to vector<1x16x32xf32>
    %6 = arith.addf %3, %5 : vector<1x16x32xf32>
    %c0_9 = arith.constant 0 : index
    %c1 = arith.constant 1 : index
    %c0_10 = arith.constant 0 : index
    %7 = vector.load %arg4[%c0_9, %c1, %c0_10] : memref<1x17x32xf32, #tpu.memory_space<vmem>>, vector<1x16x32xf32>
    tpu.vector_store %arg4[%c0_9, %c1, %c0_10], %6 {strides = array<i32>} : memref<1x17x32xf32, #tpu.memory_space<vmem>>, vector<1x16x32xf32>,
    return
  }
  func.func @transform_0(%arg0: i32) -> (i32, i32, i32) {
    %c0_i32 = arith.constant 0 : i32
    %c0_i32_0 = arith.constant 0 : i32
    %c0_i32_1 = arith.constant 0 : i32
    return %arg0, %c0_i32, %c0_i32_0 : i32, i32, i32
  }
  func.func @transform_1(%arg0: i32) -> (i32, i32) {
    %c0_i32 = arith.constant 0 : i32
    %c0_i32_0 = arith.constant 0 : i32
    %c0_i32_1 = arith.constant 0 : i32
    return %c0_i32, %c0_i32_0 : i32, i32
  }
  func.func @transform_2(%arg0: i32) -> (i32, i32) {
    %c0_i32 = arith.constant 0 : i32
    %c0_i32_0 = arith.constant 0 : i32
    %c0_i32_1 = arith.constant 0 : i32
    return %c0_i32, %c0_i32_0 : i32, i32
  }
  func.func @transform_3(%arg0: i32) -> (i32, i32, i32) {
    %c0_i32 = arith.constant 0 : i32
    %c0_i32_0 = arith.constant 0 : i32
    %c0_i32_1 = arith.constant 0 : i32
    return %arg0, %c0_i32, %c0_i32_0 : i32, i32, i32
  }
}

</mosaic_0001>

<llo_original>
// kernel: tpu_custom_call.1
$region0: #{tpu_custom_call.1}
  #allocation0 [shape = 'u32[]', space=smem, size = 0x4, offset = 0x4, fixed_abs, tag = 'smem constant byte address 0x4 - core index']
  #allocation1 [shape = 'u32[144,128]{1,0:T(1,128)}', space=vmem, size = 0x12000, scoped, tag = 'internal scratch']
  %s0 = inlined_call_operand.hbm [shape: f32[2,16,32], index: 0, kind: input, shape index: {}]
  %s1 = inlined_call_operand.vmem [shape: f32[1,32], index: 1, kind: input, shape index: {}]
  %s2 = inlined_call_operand.hbm [shape: f32[16,32], index: 2, kind: input, shape index: {}]
  %s3 = inlined_call_operand.vmem [shape: f32[2,17,32], index: 3, kind: output, shape index: {}]
  %s4 = sld [smem:[#allocation0]]
  $region53: #{tpu_custom_call.1} parent=0
    _
  %s6 = ssub.s32 1, %s4
  %s7 = scalar_select 0, %s6, %s4
  $region1: #{tpu_custom_call.1} parent=0
    #allocation2 [shape = 'u8[16384]{0}', space=vmem, size = 0x4000, scoped, tag = 'input window, operand 0']
    #allocation3 [shape = 's32[2]{0}', space=sflag, size = 0x8, scoped, tag = 'scoped memory for tpu_custom_call.1']
    #allocation4 [shape = 'u8[8192]{0}', space=vmem, size = 0x2000, scoped, tag = 'input window, operand 2, single buffered']
    #allocation5 [shape = 's32[1]{0}', space=sflag, size = 0x4, scoped, tag = 'scoped memory for tpu_custom_call.1']
    %8 = vsyncpa [#allocation3], 0
    %s9 = scalar_lea.sflag [#allocation3], 1
    %10 = vsyncpa %s9, 0
    %11 = vsyncpa [#allocation5], 0
    loop: start=0, step=1, limit=4
    $region2: #{tpu_custom_call.1} parent=1 // loop_pre_header
      _
    $region3: #{tpu_custom_call.1} parent=1 // loop_header
      %s13 = sphi 0, %s17
      %p14 = scmp.ge.s32.totalorder %s13, 4
      %s23 = sphi 0, %s25
      %s26 = sphi 0, %s23
      %s27 = sphi 0, %s26
      %s43 = sphi 0, %s27
      %s47 = sphi 0, %s47
      %s49 = sphi 0, %s47
      %s50 = sphi 0, %s49
      %s64 = sphi 0, %s50
      %s68 = sphi 0, %s68
      %s70 = sphi 0, %s68
      %s71 = sphi 0, %s70
      %s85 = sphi 0, %s71
      %s91 = sphi 0, %s93
      %s94 = sphi 0, %s91
      %s95 = sphi 0, %s94
      %s111 = sphi 0, %s95
    $region4: #{tpu_custom_call.1} parent=1 // loop_header_branch
      %16 = sbr.rel (%p14) target = $region8
    $region5: #{tpu_custom_call.1} parent=1 // loop_body
      %s18 = ssub.s32 %s13, 1
      %s19 = ssub.s32 %s13, 2
      %s20 = sadd.s32 %s13, 1
      %s21 = ssub.s32 %s13, %s20
      %p22 = scmp.eq.s32.totalorder %s21, 0
      %s24 = sadd.s32 %s23, 1
      %s25 = scalar_select %p22, %s23, %s24
      %p28 = pneg %p22
      %p29 = scmp.eq.s32.totalorder %s13, 1
      %p30 = por %p28, %p29
      %p31 = scmp.ne.s32.totalorder %s23, %s26
      %p32 = scmp.eq.s32.totalorder %s13, 0
      %p33 = por %p31, %p32
      %p34 = scmp.ne.s32.totalorder %s23, %s26
      %p35 = scmp.eq.s32.totalorder %s18, 1
      %p36 = por %p34, %p35
      %p37 = scmp.ne.s32.totalorder %s26, %s27
      %p38 = scmp.eq.s32.totalorder %s18, 0
      %p39 = por %p37, %p38
      %p40 = scmp.ne.s32.totalorder %s26, %s27
      %p41 = scmp.eq.s32.totalorder %s19, 1
      %p42 = por %p40, %p41
      %p44 = scmp.ne.s32.totalorder %s27, %s43
      %p45 = scmp.eq.s32.totalorder %s19, 0
      %p46 = por %p44, %p45
      %s48 = sadd.s32 %s47, 1
      %p51 = scmp.eq.s32.totalorder %s13, 1
      %p52 = scmp.ne.s32.totalorder %s47, %s49
      %p53 = scmp.eq.s32.totalorder %s13, 0
      %p54 = por %p52, %p53
      %p55 = scmp.ne.s32.totalorder %s47, %s49
      %p56 = scmp.eq.s32.totalorder %s18, 1
      %p57 = por %p55, %p56
      %p58 = scmp.ne.s32.totalorder %s49, %s50
      %p59 = scmp.eq.s32.totalorder %s18, 0
      %p60 = por %p58, %p59
      %p61 = scmp.ne.s32.totalorder %s49, %s50
      %p62 = scmp.eq.s32.totalorder %s19, 1
      %p63 = por %p61, %p62
      %p65 = scmp.ne.s32.totalorder %s50, %s64
      %p66 = scmp.eq.s32.totalorder %s19, 0
      %p67 = por %p65, %p66
      %s69 = sadd.s32 %s68, 1
      %p72 = scmp.eq.s32.totalorder %s13, 1
      %p73 = scmp.ne.s32.totalorder %s68, %s70
      %p74 = scmp.eq.s32.totalorder %s13, 0
      %p75 = por %p73, %p74
      %p76 = scmp.ne.s32.totalorder %s68, %s70
      %p77 = scmp.eq.s32.totalorder %s18, 1
      %p78 = por %p76, %p77
      %p79 = scmp.ne.s32.totalorder %s70, %s71
      %p80 = scmp.eq.s32.totalorder %s18, 0
      %p81 = por %p79, %p80
      %p82 = scmp.ne.s32.totalorder %s70, %s71
      %p83 = scmp.eq.s32.totalorder %s19, 1
      %p84 = por %p82, %p83
      %p86 = scmp.ne.s32.totalorder %s71, %s85
      %p87 = scmp.eq.s32.totalorder %s19, 0
      %p88 = por %p86, %p87
      %s89 = ssub.s32 %s13, %s20
      %p90 = scmp.eq.s32.totalorder %s89, 0
      %s92 = sadd.s32 %s91, 1
      %s93 = scalar_select %p90, %s91, %s92
      %p96 = pneg %p90
      %p97 = scmp.eq.s32.totalorder %s13, 1
      %p98 = por %p96, %p97
      %p99 = scmp.ne.s32.totalorder %s91, %s94
      %p100 = scmp.eq.s32.totalorder %s13, 0
      %p101 = por %p99, %p100
      %p102 = scmp.ne.s32.totalorder %s91, %s94
      %p103 = scmp.eq.s32.totalorder %s18, 1
      %p104 = por %p102, %p103
      %p105 = scmp.ne.s32.totalorder %s94, %s95
      %p106 = scmp.eq.s32.totalorder %s18, 0
      %p107 = por %p105, %p106
      %p108 = scmp.ne.s32.totalorder %s94, %s95
      %p109 = scmp.eq.s32.totalorder %s19, 1
      %p110 = por %p108, %p109
      %p112 = scmp.ne.s32.totalorder %s95, %s111
      %p113 = scmp.eq.s32.totalorder %s19, 0
      %p114 = por %p112, %p113
      %p115 = scmp.le.s32.totalorder 1, %s13
      %p116 = scmp.lt.s32.totalorder %s13, 3
      %p117 = pnand %p115, %p116
      %p118 = pneg %p117
      // Predicated region
      $region9: #{tpu_custom_call.1} parent=5 // pred_check
        _
      $region10: #{tpu_custom_call.1} parent=5 // pred_check_branch
        %120 = sbr.rel (%p117) target = $region12
      $region11: #{tpu_custom_call.1} parent=5 // pred_region
        %s121 = ssub.s32 %s13, 1
        // Predicated region
        $region13: #{tpu_custom_call.1} parent=11 // pred_check
          %p122 = pneg %p60
        $region14: #{tpu_custom_call.1} parent=11 // pred_check_branch
          %124 = sbr.rel (%p122) target = $region16
        $region15: #{tpu_custom_call.1} parent=11 // pred_region
          _
        $region16: #{tpu_custom_call.1} parent=11 // pred_fallthru
          _
        // Predicated region
        $region17: #{tpu_custom_call.1} parent=11 // pred_check
          %p125 = pneg %p81
        $region18: #{tpu_custom_call.1} parent=11 // pred_check_branch
          %127 = sbr.rel (%p125) target = $region20
        $region19: #{tpu_custom_call.1} parent=11 // pred_region
          %s129 = ssub.s32 256, 256
          %130 = vsyncadd [#allocation5], %s129
          %s131 = sshll.u32 [#allocation4], 4
          %s132 = int_to_ptr.vmem [resolvable:$true] %s131
          %137 = dma.hbm_to_vmem [thread:$0]  %s2, 256, %s132, [#allocation5], 128, 128, 8
        $region20: #{tpu_custom_call.1} parent=11 // pred_fallthru
          _
      $region12: #{tpu_custom_call.1} parent=5 // pred_fallthru
        _
      %p138 = scmp.lt.s32.totalorder %s13, 2
      // Predicated region
      $region21: #{tpu_custom_call.1} parent=5 // pred_check
        %p139 = pneg %p138
      $region22: #{tpu_custom_call.1} parent=5 // pred_check_branch
        %141 = sbr.rel (%p139) target = $region24
      $region23: #{tpu_custom_call.1} parent=5 // pred_region
        // Predicated region
        $region25: #{tpu_custom_call.1} parent=23 // pred_check
          %p142 = pneg %p33
        $region26: #{tpu_custom_call.1} parent=23 // pred_check_branch
          %144 = sbr.rel (%p142) target = $region28
        $region27: #{tpu_custom_call.1} parent=23 // pred_region
          %s145 = sand.u32 %s23, 1
          %s146 = scalar_lea.sflag [#allocation3], %s145
          %s147 = sand.u32 %s23, 1
          %s148 = smul.addr %s147, 16
          %s149 = scalar_lea.vmem [#allocation2], %s148
          %s151 = ssub.s32 256, 256
          %152 = vsyncadd %s146, %s151
          %s153 = smul.addr %s13, 2
          %s154 = smul.addr %s153, 128
          %s155 = scalar_lea.hbm %s0, %s154
          %s156 = sshll.u32 %s149, 4
          %s157 = int_to_ptr.vmem [resolvable:$true] %s156
          %162 = dma.hbm_to_vmem [thread:$0]  %s155, 256, %s157, %s146, 128, 128, 8
        $region28: #{tpu_custom_call.1} parent=23 // pred_fallthru
          _
      $region24: #{tpu_custom_call.1} parent=5 // pred_fallthru
        _
      %p163 = scmp.le.s32.totalorder 1, %s13
      %p164 = scmp.lt.s32.totalorder %s13, 3
      %p165 = pnand %p163, %p164
      %p166 = pneg %p165
      // Predicated region
      $region29: #{tpu_custom_call.1} parent=5 // pred_check
        _
      $region30: #{tpu_custom_call.1} parent=5 // pred_check_branch
        %168 = sbr.rel (%p165) target = $region32
      $region31: #{tpu_custom_call.1} parent=5 // pred_region
        %s169 = ssub.s32 %s13, 1
        %s170 = sand.u32 %s26, 1
        %s171 = scalar_lea.sflag [#allocation3], %s170
        %s172 = sand.u32 %s26, 1
        %s173 = smul.addr %s172, 16
        %s174 = scalar_lea.vmem [#allocation2], %s173
        // Predicated region
        $region33: #{tpu_custom_call.1} parent=31 // pred_check
          %p175 = pneg %p39
        $region34: #{tpu_custom_call.1} parent=31 // pred_check_branch
          %177 = sbr.rel (%p175) target = $region36
        $region35: #{tpu_custom_call.1} parent=31 // pred_region
          %178 = dma.done %s171, 256
        $region36: #{tpu_custom_call.1} parent=31 // pred_fallthru
          _
        // Predicated region
        $region37: #{tpu_custom_call.1} parent=31 // pred_check
          %p179 = pneg %p81
        $region38: #{tpu_custom_call.1} parent=31 // pred_check_branch
          %181 = sbr.rel (%p179) target = $region40
        $region39: #{tpu_custom_call.1} parent=31 // pred_region
          %182 = dma.done [#allocation5], 256
        $region40: #{tpu_custom_call.1} parent=31 // pred_fallthru
          _
        %s183 = sand.u32 %s26, 1
        %s184 = scalar_lea.sflag [#allocation3], %s183
        %s185 = sand.u32 %s26, 1
        %s186 = smul.addr %s185, 16
        %s187 = scalar_lea.vmem [#allocation2], %s186
        %p188 = pneg %p39
        %p189 = pneg %p36
        %p190 = pneg %p60
        %p191 = pneg %p57
        %p192 = pneg %p81
        %p193 = pneg %p78
        %p194 = pneg %p107
        %p195 = pneg %p104
        %p196 = scmp.lt.s32.totalorder %s18, 1
        %s197 = scalar_select %p196, %s18, 1
        %s198 = smul.addr %s197, 3
        %s199 = smul.addr %s198, 8
        %s200 = scalar_lea.vmem %s3, %s199
        %p201 = scmp.lt.s32.totalorder %s18, 1
        %s202 = scalar_select %p201, %s18, 1
        %s203 = smul.addr %s202, 3
        %s204 = smul.addr %s203, 8
        %s205 = scalar_lea.vmem %s3, %s204
        %v206 = vld [vmem:[%s1] sm:$0x1]
        %vm207 = vcmask 253952
        %208 = vst.msk [vmem:[%s205] sm:$0x1] %vm207, %v206
        %v209 = vld [vmem:[%s174] sm:$0xff]
        %v210 = vld [vmem:[%s174 + $0x8] sm:$0xff]
        %v211 = vld [vmem:[#allocation4] sm:$0xff]
        %v212 = vld [vmem:[#allocation4 + $0x8] sm:$0xff]
        %v213 = vadd.f32 %v209, %v211
        %v214 = vadd.f32 %v210, %v212
        %vm215 = vcmask 261120
        %216 = vst.msk [vmem:[%s205 + $0x1] sm:$0xff] %vm215, %v213
        %217 = vst.msk [vmem:[%s205 + $0x9] sm:$0xff] %vm215, %v214
        %p218 = scmp.lt.s32.totalorder %s18, 1
        %s219 = scalar_select %p218, %s18, 1
        %s220 = smul.addr %s219, 3
        %s221 = smul.addr %s220, 8
        %s222 = scalar_lea.vmem %s3, %s221
        // Predicated region
        $region41: #{tpu_custom_call.1} parent=31 // pred_check
          %p223 = pneg %p104
        $region42: #{tpu_custom_call.1} parent=31 // pred_check_branch
          %225 = sbr.rel (%p223) target = $region44
        $region43: #{tpu_custom_call.1} parent=31 // pred_region
          _
        $region44: #{tpu_custom_call.1} parent=31 // pred_fallthru
          _
      $region32: #{tpu_custom_call.1} parent=5 // pred_fallthru
        _
      %p226 = scmp.le.s32.totalorder 2, %s13
      // Predicated region
      $region45: #{tpu_custom_call.1} parent=5 // pred_check
        %p227 = pneg %p226
      $region46: #{tpu_custom_call.1} parent=5 // pred_check_branch
        %229 = sbr.rel (%p227) target = $region48
      $region47: #{tpu_custom_call.1} parent=5 // pred_region
        %s230 = ssub.s32 %s13, 2
        // Predicated region
        $region49: #{tpu_custom_call.1} parent=47 // pred_check
          %p231 = pneg %p110
        $region50: #{tpu_custom_call.1} parent=47 // pred_check_branch
          %233 = sbr.rel (%p231) target = $region52
        $region51: #{tpu_custom_call.1} parent=47 // pred_region
          %p234 = scmp.lt.s32.totalorder %s19, 1
          %s235 = scalar_select %p234, %s19, 1
          %s236 = smul.addr %s235, 3
          %s237 = smul.addr %s236, 8
          %s238 = scalar_lea.vmem %s3, %s237
        $region52: #{tpu_custom_call.1} parent=47 // pred_fallthru
          _
      $region48: #{tpu_custom_call.1} parent=5 // pred_fallthru
        _
    $region6: #{tpu_custom_call.1} parent=1 // loop_footer
      %s17 = sadd.s32 1, %s13
    $region7: #{tpu_custom_call.1} parent=1 // loop_footer_branch
      %12 = sbr.rel target = $region3
    $region8: #{tpu_custom_call.1} parent=1 // loop_exit
      _
    %239 = vsyncpa [#allocation3], 1
    %s240 = scalar_lea.sflag [#allocation3], 1
    %241 = vsyncpa %s240, 1
    %242 = vsyncpa [#allocation5], 1

// kernel: tpu_custom_call.1
$region0: #{tpu_custom_call.1}
  #allocation0 [shape = 'u32[]', space=smem, size = 0x4, offset = 0x4, fixed_abs, tag = 'smem constant byte address 0x4 - core index']
  #allocation1 [shape = 'u32[144,128]{1,0:T(1,128)}', space=vmem, size = 0x12000, scoped, tag = 'internal scratch']
  %s0 = inlined_call_operand.hbm [shape: f32[2,16,32], index: 0, kind: input, shape index: {}]
  %s1 = inlined_call_operand.vmem [shape: f32[1,32], index: 1, kind: input, shape index: {}]
  %s2 = inlined_call_operand.hbm [shape: f32[16,32], index: 2, kind: input, shape index: {}]
  %s3 = inlined_call_operand.vmem [shape: f32[2,17,32], index: 3, kind: output, shape index: {}]
  %s4 = sld [smem:[#allocation0]]
  $region53: #{tpu_custom_call.1} parent=0
    _
  %s6 = ssub.s32 1, %s4
  %s7 = scalar_select 0, %s6, %s4
  $region1: #{tpu_custom_call.1} parent=0
    #allocation2 [shape = 'u8[16384]{0}', space=vmem, size = 0x4000, scoped, tag = 'input window, operand 0']
    #allocation3 [shape = 's32[2]{0}', space=sflag, size = 0x8, scoped, tag = 'scoped memory for tpu_custom_call.1']
    #allocation4 [shape = 'u8[8192]{0}', space=vmem, size = 0x2000, scoped, tag = 'input window, operand 2, single buffered']
    #allocation5 [shape = 's32[1]{0}', space=sflag, size = 0x4, scoped, tag = 'scoped memory for tpu_custom_call.1']
    %8 = vsyncpa [#allocation3], 0
    %s9 = scalar_lea.sflag [#allocation3], 1
    %10 = vsyncpa %s9, 0
    %11 = vsyncpa [#allocation5], 0
    loop: start=0, step=1, limit=4
    $region2: #{tpu_custom_call.1} parent=1 // loop_pre_header
      _
    $region3: #{tpu_custom_call.1} parent=1 // loop_header
      %s13 = sphi 0, %s17
      %p14 = scmp.ge.s32.totalorder %s13, 4
      %s23 = sphi 0, %s25
      %s26 = sphi 0, %s23
      %s27 = sphi 0, %s26
      %s43 = sphi 0, %s27
      %s47 = sphi 0, %s47
      %s49 = sphi 0, %s47
      %s50 = sphi 0, %s49
      %s64 = sphi 0, %s50
      %s68 = sphi 0, %s68
      %s70 = sphi 0, %s68
      %s71 = sphi 0, %s70
      %s85 = sphi 0, %s71
      %s91 = sphi 0, %s93
      %s94 = sphi 0, %s91
      %s95 = sphi 0, %s94
      %s111 = sphi 0, %s95
    $region4: #{tpu_custom_call.1} parent=1 // loop_header_branch
      %16 = sbr.rel (%p14) target = $region8
    $region5: #{tpu_custom_call.1} parent=1 // loop_body
      %s18 = ssub.s32 %s13, 1
      %s19 = ssub.s32 %s13, 2
      %s20 = sadd.s32 %s13, 1
      %s21 = ssub.s32 %s13, %s20
      %p22 = scmp.eq.s32.totalorder %s21, 0
      %s24 = sadd.s32 %s23, 1
      %s25 = scalar_select %p22, %s23, %s24
      %p28 = pneg %p22
      %p29 = scmp.eq.s32.totalorder %s13, 1
      %p30 = por %p28, %p29
      %p31 = scmp.ne.s32.totalorder %s23, %s26
      %p32 = scmp.eq.s32.totalorder %s13, 0
      %p33 = por %p31, %p32
      %p34 = scmp.ne.s32.totalorder %s23, %s26
      %p35 = scmp.eq.s32.totalorder %s18, 1
      %p36 = por %p34, %p35
      %p37 = scmp.ne.s32.totalorder %s26, %s27
      %p38 = scmp.eq.s32.totalorder %s18, 0
      %p39 = por %p37, %p38
      %p40 = scmp.ne.s32.totalorder %s26, %s27
      %p41 = scmp.eq.s32.totalorder %s19, 1
      %p42 = por %p40, %p41
      %p44 = scmp.ne.s32.totalorder %s27, %s43
      %p45 = scmp.eq.s32.totalorder %s19, 0
      %p46 = por %p44, %p45
      %s48 = sadd.s32 %s47, 1
      %p51 = scmp.eq.s32.totalorder %s13, 1
      %p52 = scmp.ne.s32.totalorder %s47, %s49
      %p53 = scmp.eq.s32.totalorder %s13, 0
      %p54 = por %p52, %p53
      %p55 = scmp.ne.s32.totalorder %s47, %s49
      %p56 = scmp.eq.s32.totalorder %s18, 1
      %p57 = por %p55, %p56
      %p58 = scmp.ne.s32.totalorder %s49, %s50
      %p59 = scmp.eq.s32.totalorder %s18, 0
      %p60 = por %p58, %p59
      %p61 = scmp.ne.s32.totalorder %s49, %s50
      %p62 = scmp.eq.s32.totalorder %s19, 1
      %p63 = por %p61, %p62
      %p65 = scmp.ne.s32.totalorder %s50, %s64
      %p66 = scmp.eq.s32.totalorder %s19, 0
      %p67 = por %p65, %p66
      %s69 = sadd.s32 %s68, 1
      %p72 = scmp.eq.s32.totalorder %s13, 1
      %p73 = scmp.ne.s32.totalorder %s68, %s70
      %p74 = scmp.eq.s32.totalorder %s13, 0
      %p75 = por %p73, %p74
      %p76 = scmp.ne.s32.totalorder %s68, %s70
      %p77 = scmp.eq.s32.totalorder %s18, 1
      %p78 = por %p76, %p77
      %p79 = scmp.ne.s32.totalorder %s70, %s71
      %p80 = scmp.eq.s32.totalorder %s18, 0
      %p81 = por %p79, %p80
      %p82 = scmp.ne.s32.totalorder %s70, %s71
      %p83 = scmp.eq.s32.totalorder %s19, 1
      %p84 = por %p82, %p83
      %p86 = scmp.ne.s32.totalorder %s71, %s85
      %p87 = scmp.eq.s32.totalorder %s19, 0
      %p88 = por %p86, %p87
      %s89 = ssub.s32 %s13, %s20
      %p90 = scmp.eq.s32.totalorder %s89, 0
      %s92 = sadd.s32 %s91, 1
      %s93 = scalar_select %p90, %s91, %s92
      %p96 = pneg %p90
      %p97 = scmp.eq.s32.totalorder %s13, 1
      %p98 = por %p96, %p97
      %p99 = scmp.ne.s32.totalorder %s91, %s94
      %p100 = scmp.eq.s32.totalorder %s13, 0
      %p101 = por %p99, %p100
      %p102 = scmp.ne.s32.totalorder %s91, %s94
      %p103 = scmp.eq.s32.totalorder %s18, 1
      %p104 = por %p102, %p103
      %p105 = scmp.ne.s32.totalorder %s94, %s95
      %p106 = scmp.eq.s32.totalorder %s18, 0
      %p107 = por %p105, %p106
      %p108 = scmp.ne.s32.totalorder %s94, %s95
      %p109 = scmp.eq.s32.totalorder %s19, 1
      %p110 = por %p108, %p109
      %p112 = scmp.ne.s32.totalorder %s95, %s111
      %p113 = scmp.eq.s32.totalorder %s19, 0
      %p114 = por %p112, %p113
      %p115 = scmp.le.s32.totalorder 1, %s13
      %p116 = scmp.lt.s32.totalorder %s13, 3
      %p117 = pnand %p115, %p116
      %p118 = pneg %p117
      // Predicated region
      $region9: #{tpu_custom_call.1} parent=5 // pred_check
        _
      $region10: #{tpu_custom_call.1} parent=5 // pred_check_branch
        %120 = sbr.rel (%p117) target = $region12
      $region11: #{tpu_custom_call.1} parent=5 // pred_region
        %s121 = ssub.s32 %s13, 1
        // Predicated region
        $region13: #{tpu_custom_call.1} parent=11 // pred_check
          %p122 = pneg %p60
        $region14: #{tpu_custom_call.1} parent=11 // pred_check_branch
          %124 = sbr.rel (%p122) target = $region16
        $region15: #{tpu_custom_call.1} parent=11 // pred_region
          _
        $region16: #{tpu_custom_call.1} parent=11 // pred_fallthru
          _
        // Predicated region
        $region17: #{tpu_custom_call.1} parent=11 // pred_check
          %p125 = pneg %p81
        $region18: #{tpu_custom_call.1} parent=11 // pred_check_branch
          %127 = sbr.rel (%p125) target = $region20
        $region19: #{tpu_custom_call.1} parent=11 // pred_region
          %s129 = ssub.s32 256, 256
          %130 = vsyncadd [#allocation5], %s129
          %s131 = sshll.u32 [#allocation4], 4
          %s132 = int_to_ptr.vmem [resolvable:$true] %s131
          %137 = dma.hbm_to_vmem [thread:$0]  %s2, 256, %s132, [#allocation5], 128, 128, 8
        $region20: #{tpu_custom_call.1} parent=11 // pred_fallthru
          _
      $region12: #{tpu_custom_call.1} parent=5 // pred_fallthru
        _
      %p138 = scmp.lt.s32.totalorder %s13, 2
      // Predicated region
      $region21: #{tpu_custom_call.1} parent=5 // pred_check
        %p139 = pneg %p138
      $region22: #{tpu_custom_call.1} parent=5 // pred_check_branch
        %141 = sbr.rel (%p139) target = $region24
      $region23: #{tpu_custom_call.1} parent=5 // pred_region
        // Predicated region
        $region25: #{tpu_custom_call.1} parent=23 // pred_check
          %p142 = pneg %p33
        $region26: #{tpu_custom_call.1} parent=23 // pred_check_branch
          %144 = sbr.rel (%p142) target = $region28
        $region27: #{tpu_custom_call.1} parent=23 // pred_region
          %s145 = sand.u32 %s23, 1
          %s146 = scalar_lea.sflag [#allocation3], %s145
          %s147 = sand.u32 %s23, 1
          %s148 = smul.addr %s147, 16
          %s149 = scalar_lea.vmem [#allocation2], %s148
          %s151 = ssub.s32 256, 256
          %152 = vsyncadd %s146, %s151
          %s153 = smul.addr %s13, 2
          %s154 = smul.addr %s153, 128
          %s155 = scalar_lea.hbm %s0, %s154
          %s156 = sshll.u32 %s149, 4
          %s157 = int_to_ptr.vmem [resolvable:$true] %s156
          %162 = dma.hbm_to_vmem [thread:$0]  %s155, 256, %s157, %s146, 128, 128, 8
        $region28: #{tpu_custom_call.1} parent=23 // pred_fallthru
          _
      $region24: #{tpu_custom_call.1} parent=5 // pred_fallthru
        _
      %p163 = scmp.le.s32.totalorder 1, %s13
      %p164 = scmp.lt.s32.totalorder %s13, 3
      %p165 = pnand %p163, %p164
      %p166 = pneg %p165
      // Predicated region
      $region29: #{tpu_custom_call.1} parent=5 // pred_check
        _
      $region30: #{tpu_custom_call.1} parent=5 // pred_check_branch
        %168 = sbr.rel (%p165) target = $region32
      $region31: #{tpu_custom_call.1} parent=5 // pred_region
        %s169 = ssub.s32 %s13, 1
        %s170 = sand.u32 %s26, 1
        %s171 = scalar_lea.sflag [#allocation3], %s170
        %s172 = sand.u32 %s26, 1
        %s173 = smul.addr %s172, 16
        %s174 = scalar_lea.vmem [#allocation2], %s173
        // Predicated region
        $region33: #{tpu_custom_call.1} parent=31 // pred_check
          %p175 = pneg %p39
        $region34: #{tpu_custom_call.1} parent=31 // pred_check_branch
          %177 = sbr.rel (%p175) target = $region36
        $region35: #{tpu_custom_call.1} parent=31 // pred_region
          %178 = dma.done %s171, 256
        $region36: #{tpu_custom_call.1} parent=31 // pred_fallthru
          _
        // Predicated region
        $region37: #{tpu_custom_call.1} parent=31 // pred_check
          %p179 = pneg %p81
        $region38: #{tpu_custom_call.1} parent=31 // pred_check_branch
          %181 = sbr.rel (%p179) target = $region40
        $region39: #{tpu_custom_call.1} parent=31 // pred_region
          %182 = dma.done [#allocation5], 256
        $region40: #{tpu_custom_call.1} parent=31 // pred_fallthru
          _
        %s183 = sand.u32 %s26, 1
        %s184 = scalar_lea.sflag [#allocation3], %s183
        %s185 = sand.u32 %s26, 1
        %s186 = smul.addr %s185, 16
        %s187 = scalar_lea.vmem [#allocation2], %s186
        %p188 = pneg %p39
        %p189 = pneg %p36
        %p190 = pneg %p60
        %p191 = pneg %p57
        %p192 = pneg %p81
        %p193 = pneg %p78
        %p194 = pneg %p107
        %p195 = pneg %p104
        %p196 = scmp.lt.s32.totalorder %s18, 1
        %s197 = scalar_select %p196, %s18, 1
        %s198 = smul.addr %s197, 3
        %s199 = smul.addr %s198, 8
        %s200 = scalar_lea.vmem %s3, %s199
        %p201 = scmp.lt.s32.totalorder %s18, 1
        %s202 = scalar_select %p201, %s18, 1
        %s203 = smul.addr %s202, 3
        %s204 = smul.addr %s203, 8
        %s205 = scalar_lea.vmem %s3, %s204
        %v206 = vld [vmem:[%s1] sm:$0x1]
        %vm207 = vcmask 253952
        %208 = vst.msk [vmem:[%s205] sm:$0x1] %vm207, %v206
        %v209 = vld [vmem:[%s174] sm:$0xff]
        %v210 = vld [vmem:[%s174 + $0x8] sm:$0xff]
        %v211 = vld [vmem:[#allocation4] sm:$0xff]
        %v212 = vld [vmem:[#allocation4 + $0x8] sm:$0xff]
        %v213 = vadd.f32 %v209, %v211
        %v214 = vadd.f32 %v210, %v212
        %vm215 = vcmask 261120
        %216 = vst.msk [vmem:[%s205 + $0x1] sm:$0xff] %vm215, %v213
        %217 = vst.msk [vmem:[%s205 + $0x9] sm:$0xff] %vm215, %v214
        %p218 = scmp.lt.s32.totalorder %s18, 1
        %s219 = scalar_select %p218, %s18, 1
        %s220 = smul.addr %s219, 3
        %s221 = smul.addr %s220, 8
        %s222 = scalar_lea.vmem %s3, %s221
        // Predicated region
        $region41: #{tpu_custom_call.1} parent=31 // pred_check
          %p223 = pneg %p104
        $region42: #{tpu_custom_call.1} parent=31 // pred_check_branch
          %225 = sbr.rel (%p223) target = $region44
        $region43: #{tpu_custom_call.1} parent=31 // pred_region
          _
        $region44: #{tpu_custom_call.1} parent=31 // pred_fallthru
          _
      $region32: #{tpu_custom_call.1} parent=5 // pred_fallthru
        _
      %p226 = scmp.le.s32.totalorder 2, %s13
      // Predicated region
      $region45: #{tpu_custom_call.1} parent=5 // pred_check
        %p227 = pneg %p226
      $region46: #{tpu_custom_call.1} parent=5 // pred_check_branch
        %229 = sbr.rel (%p227) target = $region48
      $region47: #{tpu_custom_call.1} parent=5 // pred_region
        %s230 = ssub.s32 %s13, 2
        // Predicated region
        $region49: #{tpu_custom_call.1} parent=47 // pred_check
          %p231 = pneg %p110
        $region50: #{tpu_custom_call.1} parent=47 // pred_check_branch
          %233 = sbr.rel (%p231) target = $region52
        $region51: #{tpu_custom_call.1} parent=47 // pred_region
          %p234 = scmp.lt.s32.totalorder %s19, 1
          %s235 = scalar_select %p234, %s19, 1
          %s236 = smul.addr %s235, 3
          %s237 = smul.addr %s236, 8
          %s238 = scalar_lea.vmem %s3, %s237
        $region52: #{tpu_custom_call.1} parent=47 // pred_fallthru
          _
      $region48: #{tpu_custom_call.1} parent=5 // pred_fallthru
        _
    $region6: #{tpu_custom_call.1} parent=1 // loop_footer
      %s17 = sadd.s32 1, %s13
    $region7: #{tpu_custom_call.1} parent=1 // loop_footer_branch
      %12 = sbr.rel target = $region3
    $region8: #{tpu_custom_call.1} parent=1 // loop_exit
      _
    %239 = vsyncpa [#allocation3], 1
    %s240 = scalar_lea.sflag [#allocation3], 1
    %241 = vsyncpa %s240, 1
    %242 = vsyncpa [#allocation5], 1

</llo_original>
